<compile_context>
chip_gen: v7x
topology: tpu7x:2x2x1
jax: 0.10.0
libtpu: 0.0.40
codegen_flags: <defaults>
</compile_context>

<pallas_src>
import jax
import jax.numpy as jnp
from jax.experimental import pallas as pl
from jax.experimental.pallas import tpu as pltpu

# ---- problem constants (from the PyTorch module) ----------------------------
CIN, COUT = 1, 2
KH = KW = 3
STRIDE = 3
F = COUT * KH * KW  # 18 output taps per input pixel

LANE = 128


def _convt_tanh_kernel(x_ref, w_ref, b_ref, o_ref):
    # x_ref: (1, TP) pixels on lanes (VMEM); w_ref/b_ref: (F,) scalars (SMEM);
    # o_ref: (F, TP) (VMEM).
    x = x_ref[...]  # (1, TP)
    for f in range(F):  # fully unrolled: 18 scalar-times-vector + bias + tanh
        o_ref[pl.ds(f, 1), :] = jnp.tanh(x * w_ref[f] + b_ref[f])


def conv_transpose_tanh(x_nchw, weight, bias, *, lane_chunk=3072):
    """x_nchw: (N, 1, H, W) f32; weight: (1, Cout, KH, KW); bias: (Cout,)."""
    N, Cin, H, W = x_nchw.shape
    assert Cin == CIN
    P = N * H * W

    # Pad the pixel (lane) axis up to a multiple of the chunk width so every
    # grid step sees full, unmasked vregs.
    n_chunks = pl.cdiv(P, lane_chunk)
    P_pad = n_chunks * lane_chunk
    assert lane_chunk % LANE == 0

    # Cin == 1  ->  flattening NCHW to (1, N*H*W) is a free contiguous reshape;
    # pixels land on the lane axis.  Zero-pad the tail.
    x_row = x_nchw.reshape(1, P).astype(jnp.float32)
    x_row = jnp.pad(x_row, ((0, 0), (0, P_pad - P)))

    # Weight/bias as flat (F,) scalars, f = (cout, kh, kw) row-major.
    w_flat = weight.reshape(F).astype(jnp.float32)
    b_flat = jnp.repeat(bias.astype(jnp.float32), KH * KW)  # (F,)

    cost = pl.CostEstimate(
        flops=2 * F * P_pad,
        transcendentals=F * P_pad,
        bytes_accessed=4 * (P_pad + 2 * F + F * P_pad),
    )

    out_fp = pl.pallas_call(
        _convt_tanh_kernel,
        out_shape=jax.ShapeDtypeStruct((F, P_pad), jnp.float32),
        grid=(n_chunks,),
        in_specs=[
            pl.BlockSpec((1, lane_chunk), lambda i: (0, i)),
            pl.BlockSpec(memory_space=pltpu.MemorySpace.SMEM),
            pl.BlockSpec(memory_space=pltpu.MemorySpace.SMEM),
        ],
        out_specs=pl.BlockSpec((F, lane_chunk), lambda i: (0, i)),
        compiler_params=pltpu.CompilerParams(
            dimension_semantics=("parallel",)
        ),
        cost_estimate=cost,
    )(x_row, w_flat, b_flat)

    # Drop the lane padding, then depth-to-space (plain-JAX glue):
    # (Cout, KH, KW, N, H, W) -> (N, Cout, H, KH, W, KW) -> (N, Cout, H*3, W*3)
    out = out_fp[:, :P].reshape(COUT, KH, KW, N, H, W)
    out = jnp.transpose(out, (3, 0, 4, 1, 5, 2))
    return out.reshape(N, COUT, H * KH, W * KW)


def _reference(x_nchw, weight, bias):
    """Pure-JAX reference: ConvTranspose2d via lhs-dilated conv, then tanh."""
    w_flip = jnp.flip(weight, axis=(2, 3))            # (Cin, Cout, KH, KW)
    w_oihw = jnp.transpose(w_flip, (1, 0, 2, 3))      # (Cout, Cin, KH, KW)
    y = jax.lax.conv_general_dilated(
        x_nchw, w_oihw,
        window_strides=(1, 1),
        padding=[(KH - 1, KH - 1), (KW - 1, KW - 1)],
        lhs_dilation=(STRIDE, STRIDE),
        dimension_numbers=("NCHW", "OIHW", "NCHW"),
    )
    y = y + bias.reshape(1, COUT, 1, 1)
    return jnp.tanh(y)


if __name__ == "__main__":
    key = jax.random.PRNGKey(0)
    kx, kw, kb = jax.random.split(key, 3)

    # Input shape from the module: (14, 1, 72, 6)
    x = jax.random.normal(kx, (14, CIN, 72, 6), dtype=jnp.float32)
    # Deterministic synthetic parameters (ConvTranspose2d(1, 2, 3) shapes).
    weight = 0.1 * jax.random.normal(kw, (CIN, COUT, KH, KW), dtype=jnp.float32)
    bias = 0.1 * jax.random.normal(kb, (COUT,), dtype=jnp.float32)

    out = conv_transpose_tanh(x, weight, bias)
    out = jax.block_until_ready(out)

    ref = jax.block_until_ready(_reference(x, weight, bias))
    assert out.shape == (14, COUT, 216, 18), out.shape
    assert jnp.allclose(out, ref, atol=1e-5, rtol=1e-5), float(
        jnp.max(jnp.abs(out - ref))
    )
    print("KERNEL_OK")
</pallas_src>

<mosaic_0001>
module attributes {stable_mosaic.version = 11 : i64} {
  func.func @_convt_tanh_kernel(%arg0: i32, %arg1: memref<1x3072xf32, #tpu.memory_space<vmem>>, %arg2: memref<18xf32, #tpu.memory_space<smem>>, %arg3: memref<18xf32, #tpu.memory_space<smem>>, %arg4: memref<18x3072xf32, #tpu.memory_space<vmem>>) attributes {dimension_semantics = [#tpu.dimension_semantics<parallel>], iteration_bounds = array<i64: 2>, scalar_prefetch = 0 : i64, scratch_operands = 0 : i64, tpu.core_type = #tpu.core_type<tc>, window_params = [{transform_indices = @transform_0, window_bounds = array<i64: 1, 3072>}, {transform_indices = @transform_1, window_bounds = array<i64: 18>}, {transform_indices = @transform_2, window_bounds = array<i64: 18>}, {transform_indices = @transform_3, window_bounds = array<i64: 18, 3072>}]} {
    %c0 = arith.constant 0 : index
    %c0_0 = arith.constant 0 : index
    %0 = vector.load %arg1[%c0, %c0_0] : memref<1x3072xf32, #tpu.memory_space<vmem>>, vector<1x3072xf32>
    %c0_1 = arith.constant 0 : index
    %1 = memref.load %arg2[%c0_1] : memref<18xf32, #tpu.memory_space<smem>>
    %2 = vector.broadcast %1 : f32 to vector<1x3072xf32>
    %3 = arith.mulf %0, %2 : vector<1x3072xf32>
    %c0_2 = arith.constant 0 : index
    %4 = memref.load %arg3[%c0_2] : memref<18xf32, #tpu.memory_space<smem>>
    %5 = vector.broadcast %4 : f32 to vector<1x3072xf32>
    %6 = arith.addf %3, %5 : vector<1x3072xf32>
    %7 = math.tanh %6 : vector<1x3072xf32>
    %c0_3 = arith.constant 0 : index
    %c0_4 = arith.constant 0 : index
    %8 = vector.load %arg4[%c0_3, %c0_4] : memref<18x3072xf32, #tpu.memory_space<vmem>>, vector<1x3072xf32>
    tpu.vector_store %arg4[%c0_3, %c0_4], %7 {strides = array<i32>} : memref<18x3072xf32, #tpu.memory_space<vmem>>, vector<1x3072xf32>,
    %c1 = arith.constant 1 : index
    %9 = memref.load %arg2[%c1] : memref<18xf32, #tpu.memory_space<smem>>
    %10 = vector.broadcast %9 : f32 to vector<1x3072xf32>
    %11 = arith.mulf %0, %10 : vector<1x3072xf32>
    %c1_5 = arith.constant 1 : index
    %12 = memref.load %arg3[%c1_5] : memref<18xf32, #tpu.memory_space<smem>>
    %13 = vector.broadcast %12 : f32 to vector<1x3072xf32>
    %14 = arith.addf %11, %13 : vector<1x3072xf32>
    %15 = math.tanh %14 : vector<1x3072xf32>
    %c1_6 = arith.constant 1 : index
    %c0_7 = arith.constant 0 : index
    %16 = vector.load %arg4[%c1_6, %c0_7] : memref<18x3072xf32, #tpu.memory_space<vmem>>, vector<1x3072xf32>
    tpu.vector_store %arg4[%c1_6, %c0_7], %15 {strides = array<i32>} : memref<18x3072xf32, #tpu.memory_space<vmem>>, vector<1x3072xf32>,
    %c2 = arith.constant 2 : index
    %17 = memref.load %arg2[%c2] : memref<18xf32, #tpu.memory_space<smem>>
    %18 = vector.broadcast %17 : f32 to vector<1x3072xf32>
    %19 = arith.mulf %0, %18 : vector<1x3072xf32>
    %c2_8 = arith.constant 2 : index
    %20 = memref.load %arg3[%c2_8] : memref<18xf32, #tpu.memory_space<smem>>
    %21 = vector.broadcast %20 : f32 to vector<1x3072xf32>
    %22 = arith.addf %19, %21 : vector<1x3072xf32>
    %23 = math.tanh %22 : vector<1x3072xf32>
    %c2_9 = arith.constant 2 : index
    %c0_10 = arith.constant 0 : index
    %24 = vector.load %arg4[%c2_9, %c0_10] : memref<18x3072xf32, #tpu.memory_space<vmem>>, vector<1x3072xf32>
    tpu.vector_store %arg4[%c2_9, %c0_10], %23 {strides = array<i32>} : memref<18x3072xf32, #tpu.memory_space<vmem>>, vector<1x3072xf32>,
    %c3 = arith.constant 3 : index
    %25 = memref.load %arg2[%c3] : memref<18xf32, #tpu.memory_space<smem>>
    %26 = vector.broadcast %25 : f32 to vector<1x3072xf32>
    %27 = arith.mulf %0, %26 : vector<1x3072xf32>
    %c3_11 = arith.constant 3 : index
    %28 = memref.load %arg3[%c3_11] : memref<18xf32, #tpu.memory_space<smem>>
    %29 = vector.broadcast %28 : f32 to vector<1x3072xf32>
    %30 = arith.addf %27, %29 : vector<1x3072xf32>
    %31 = math.tanh %30 : vector<1x3072xf32>
    %c3_12 = arith.constant 3 : index
    %c0_13 = arith.constant 0 : index
    %32 = vector.load %arg4[%c3_12, %c0_13] : memref<18x3072xf32, #tpu.memory_space<vmem>>, vector<1x3072xf32>
    tpu.vector_store %arg4[%c3_12, %c0_13], %31 {strides = array<i32>} : memref<18x3072xf32, #tpu.memory_space<vmem>>, vector<1x3072xf32>,
    %c4 = arith.constant 4 : index
    %33 = memref.load %arg2[%c4] : memref<18xf32, #tpu.memory_space<smem>>
    %34 = vector.broadcast %33 : f32 to vector<1x3072xf32>
    %35 = arith.mulf %0, %34 : vector<1x3072xf32>
    %c4_14 = arith.constant 4 : index
    %36 = memref.load %arg3[%c4_14] : memref<18xf32, #tpu.memory_space<smem>>
    %37 = vector.broadcast %36 : f32 to vector<1x3072xf32>
    %38 = arith.addf %35, %37 : vector<1x3072xf32>
    %39 = math.tanh %38 : vector<1x3072xf32>
    %c4_15 = arith.constant 4 : index
    %c0_16 = arith.constant 0 : index
    %40 = vector.load %arg4[%c4_15, %c0_16] : memref<18x3072xf32, #tpu.memory_space<vmem>>, vector<1x3072xf32>
    tpu.vector_store %arg4[%c4_15, %c0_16], %39 {strides = array<i32>} : memref<18x3072xf32, #tpu.memory_space<vmem>>, vector<1x3072xf32>,
    %c5 = arith.constant 5 : index
    %41 = memref.load %arg2[%c5] : memref<18xf32, #tpu.memory_space<smem>>
    %42 = vector.broadcast %41 : f32 to vector<1x3072xf32>
    %43 = arith.mulf %0, %42 : vector<1x3072xf32>
    %c5_17 = arith.constant 5 : index
    %44 = memref.load %arg3[%c5_17] : memref<18xf32, #tpu.memory_space<smem>>
    %45 = vector.broadcast %44 : f32 to vector<1x3072xf32>
    %46 = arith.addf %43, %45 : vector<1x3072xf32>
    %47 = math.tanh %46 : vector<1x3072xf32>
    %c5_18 = arith.constant 5 : index
    %c0_19 = arith.constant 0 : index
    %48 = vector.load %arg4[%c5_18, %c0_19] : memref<18x3072xf32, #tpu.memory_space<vmem>>, vector<1x3072xf32>
    tpu.vector_store %arg4[%c5_18, %c0_19], %47 {strides = array<i32>} : memref<18x3072xf32, #tpu.memory_space<vmem>>, vector<1x3072xf32>,
    %c6 = arith.constant 6 : index
    %49 = memref.load %arg2[%c6] : memref<18xf32, #tpu.memory_space<smem>>
    %50 = vector.broadcast %49 : f32 to vector<1x3072xf32>
    %51 = arith.mulf %0, %50 : vector<1x3072xf32>
    %c6_20 = arith.constant 6 : index
    %52 = memref.load %arg3[%c6_20] : memref<18xf32, #tpu.memory_space<smem>>
    %53 = vector.broadcast %52 : f32 to vector<1x3072xf32>
    %54 = arith.addf %51, %53 : vector<1x3072xf32>
    %55 = math.tanh %54 : vector<1x3072xf32>
    %c6_21 = arith.constant 6 : index
    %c0_22 = arith.constant 0 : index
    %56 = vector.load %arg4[%c6_21, %c0_22] : memref<18x3072xf32, #tpu.memory_space<vmem>>, vector<1x3072xf32>
    tpu.vector_store %arg4[%c6_21, %c0_22], %55 {strides = array<i32>} : memref<18x3072xf32, #tpu.memory_space<vmem>>, vector<1x3072xf32>,
    %c7 = arith.constant 7 : index
    %57 = memref.load %arg2[%c7] : memref<18xf32, #tpu.memory_space<smem>>
    %58 = vector.broadcast %57 : f32 to vector<1x3072xf32>
    %59 = arith.mulf %0, %58 : vector<1x3072xf32>
    %c7_23 = arith.constant 7 : index
    %60 = memref.load %arg3[%c7_23] : memref<18xf32, #tpu.memory_space<smem>>
    %61 = vector.broadcast %60 : f32 to vector<1x3072xf32>
    %62 = arith.addf %59, %61 : vector<1x3072xf32>
    %63 = math.tanh %62 : vector<1x3072xf32>
    %c7_24 = arith.constant 7 : index
    %c0_25 = arith.constant 0 : index
    %64 = vector.load %arg4[%c7_24, %c0_25] : memref<18x3072xf32, #tpu.memory_space<vmem>>, vector<1x3072xf32>
    tpu.vector_store %arg4[%c7_24, %c0_25], %63 {strides = array<i32>} : memref<18x3072xf32, #tpu.memory_space<vmem>>, vector<1x3072xf32>,
    %c8 = arith.constant 8 : index
    %65 = memref.load %arg2[%c8] : memref<18xf32, #tpu.memory_space<smem>>
    %66 = vector.broadcast %65 : f32 to vector<1x3072xf32>
    %67 = arith.mulf %0, %66 : vector<1x3072xf32>
    %c8_26 = arith.constant 8 : index
    %68 = memref.load %arg3[%c8_26] : memref<18xf32, #tpu.memory_space<smem>>
    %69 = vector.broadcast %68 : f32 to vector<1x3072xf32>
    %70 = arith.addf %67, %69 : vector<1x3072xf32>
    %71 = math.tanh %70 : vector<1x3072xf32>
    %c8_27 = arith.constant 8 : index
    %c0_28 = arith.constant 0 : index
    %72 = vector.load %arg4[%c8_27, %c0_28] : memref<18x3072xf32, #tpu.memory_space<vmem>>, vector<1x3072xf32>
    tpu.vector_store %arg4[%c8_27, %c0_28], %71 {strides = array<i32>} : memref<18x3072xf32, #tpu.memory_space<vmem>>, vector<1x3072xf32>,
    %c9 = arith.constant 9 : index
    %73 = memref.load %arg2[%c9] : memref<18xf32, #tpu.memory_space<smem>>
    %74 = vector.broadcast %73 : f32 to vector<1x3072xf32>
    %75 = arith.mulf %0, %74 : vector<1x3072xf32>
    %c9_29 = arith.constant 9 : index
    %76 = memref.load %arg3[%c9_29] : memref<18xf32, #tpu.memory_space<smem>>
    %77 = vector.broadcast %76 : f32 to vector<1x3072xf32>
    %78 = arith.addf %75, %77 : vector<1x3072xf32>
    %79 = math.tanh %78 : vector<1x3072xf32>
    %c9_30 = arith.constant 9 : index
    %c0_31 = arith.constant 0 : index
    %80 = vector.load %arg4[%c9_30, %c0_31] : memref<18x3072xf32, #tpu.memory_space<vmem>>, vector<1x3072xf32>
    tpu.vector_store %arg4[%c9_30, %c0_31], %79 {strides = array<i32>} : memref<18x3072xf32, #tpu.memory_space<vmem>>, vector<1x3072xf32>,
    %c10 = arith.constant 10 : index
    %81 = memref.load %arg2[%c10] : memref<18xf32, #tpu.memory_space<smem>>
    %82 = vector.broadcast %81 : f32 to vector<1x3072xf32>
    %83 = arith.mulf %0, %82 : vector<1x3072xf32>
    %c10_32 = arith.constant 10 : index
    %84 = memref.load %arg3[%c10_32] : memref<18xf32, #tpu.memory_space<smem>>
    %85 = vector.broadcast %84 : f32 to vector<1x3072xf32>
    %86 = arith.addf %83, %85 : vector<1x3072xf32>
    %87 = math.tanh %86 : vector<1x3072xf32>
    %c10_33 = arith.constant 10 : index
    %c0_34 = arith.constant 0 : index
    %88 = vector.load %arg4[%c10_33, %c0_34] : memref<18x3072xf32, #tpu.memory_space<vmem>>, vector<1x3072xf32>
    tpu.vector_store %arg4[%c10_33, %c0_34], %87 {strides = array<i32>} : memref<18x3072xf32, #tpu.memory_space<vmem>>, vector<1x3072xf32>,
    %c11 = arith.constant 11 : index
    %89 = memref.load %arg2[%c11] : memref<18xf32, #tpu.memory_space<smem>>
    %90 = vector.broadcast %89 : f32 to vector<1x3072xf32>
    %91 = arith.mulf %0, %90 : vector<1x3072xf32>
    %c11_35 = arith.constant 11 : index
    %92 = memref.load %arg3[%c11_35] : memref<18xf32, #tpu.memory_space<smem>>
    %93 = vector.broadcast %92 : f32 to vector<1x3072xf32>
    %94 = arith.addf %91, %93 : vector<1x3072xf32>
    %95 = math.tanh %94 : vector<1x3072xf32>
    %c11_36 = arith.constant 11 : index
    %c0_37 = arith.constant 0 : index
    %96 = vector.load %arg4[%c11_36, %c0_37] : memref<18x3072xf32, #tpu.memory_space<vmem>>, vector<1x3072xf32>
    tpu.vector_store %arg4[%c11_36, %c0_37], %95 {strides = array<i32>} : memref<18x3072xf32, #tpu.memory_space<vmem>>, vector<1x3072xf32>,
    %c12 = arith.constant 12 : index
    %97 = memref.load %arg2[%c12] : memref<18xf32, #tpu.memory_space<smem>>
    %98 = vector.broadcast %97 : f32 to vector<1x3072xf32>
    %99 = arith.mulf %0, %98 : vector<1x3072xf32>
    %c12_38 = arith.constant 12 : index
    %100 = memref.load %arg3[%c12_38] : memref<18xf32, #tpu.memory_space<smem>>
    %101 = vector.broadcast %100 : f32 to vector<1x3072xf32>
    %102 = arith.addf %99, %101 : vector<1x3072xf32>
    %103 = math.tanh %102 : vector<1x3072xf32>
    %c12_39 = arith.constant 12 : index
    %c0_40 = arith.constant 0 : index
    %104 = vector.load %arg4[%c12_39, %c0_40] : memref<18x3072xf32, #tpu.memory_space<vmem>>, vector<1x3072xf32>
    tpu.vector_store %arg4[%c12_39, %c0_40], %103 {strides = array<i32>} : memref<18x3072xf32, #tpu.memory_space<vmem>>, vector<1x3072xf32>,
    %c13 = arith.constant 13 : index
    %105 = memref.load %arg2[%c13] : memref<18xf32, #tpu.memory_space<smem>>
    %106 = vector.broadcast %105 : f32 to vector<1x3072xf32>
    %107 = arith.mulf %0, %106 : vector<1x3072xf32>
    %c13_41 = arith.constant 13 : index
    %108 = memref.load %arg3[%c13_41] : memref<18xf32, #tpu.memory_space<smem>>
    %109 = vector.broadcast %108 : f32 to vector<1x3072xf32>
    %110 = arith.addf %107, %109 : vector<1x3072xf32>
    %111 = math.tanh %110 : vector<1x3072xf32>
    %c13_42 = arith.constant 13 : index
    %c0_43 = arith.constant 0 : index
    %112 = vector.load %arg4[%c13_42, %c0_43] : memref<18x3072xf32, #tpu.memory_space<vmem>>, vector<1x3072xf32>
    tpu.vector_store %arg4[%c13_42, %c0_43], %111 {strides = array<i32>} : memref<18x3072xf32, #tpu.memory_space<vmem>>, vector<1x3072xf32>,
    %c14 = arith.constant 14 : index
    %113 = memref.load %arg2[%c14] : memref<18xf32, #tpu.memory_space<smem>>
    %114 = vector.broadcast %113 : f32 to vector<1x3072xf32>
    %115 = arith.mulf %0, %114 : vector<1x3072xf32>
    %c14_44 = arith.constant 14 : index
    %116 = memref.load %arg3[%c14_44] : memref<18xf32, #tpu.memory_space<smem>>
    %117 = vector.broadcast %116 : f32 to vector<1x3072xf32>
    %118 = arith.addf %115, %117 : vector<1x3072xf32>
    %119 = math.tanh %118 : vector<1x3072xf32>
    %c14_45 = arith.constant 14 : index
    %c0_46 = arith.constant 0 : index
    %120 = vector.load %arg4[%c14_45, %c0_46] : memref<18x3072xf32, #tpu.memory_space<vmem>>, vector<1x3072xf32>
    tpu.vector_store %arg4[%c14_45, %c0_46], %119 {strides = array<i32>} : memref<18x3072xf32, #tpu.memory_space<vmem>>, vector<1x3072xf32>,
    %c15 = arith.constant 15 : index
    %121 = memref.load %arg2[%c15] : memref<18xf32, #tpu.memory_space<smem>>
    %122 = vector.broadcast %121 : f32 to vector<1x3072xf32>
    %123 = arith.mulf %0, %122 : vector<1x3072xf32>
    %c15_47 = arith.constant 15 : index
    %124 = memref.load %arg3[%c15_47] : memref<18xf32, #tpu.memory_space<smem>>
    %125 = vector.broadcast %124 : f32 to vector<1x3072xf32>
    %126 = arith.addf %123, %125 : vector<1x3072xf32>
    %127 = math.tanh %126 : vector<1x3072xf32>
    %c15_48 = arith.constant 15 : index
    %c0_49 = arith.constant 0 : index
    %128 = vector.load %arg4[%c15_48, %c0_49] : memref<18x3072xf32, #tpu.memory_space<vmem>>, vector<1x3072xf32>
    tpu.vector_store %arg4[%c15_48, %c0_49], %127 {strides = array<i32>} : memref<18x3072xf32, #tpu.memory_space<vmem>>, vector<1x3072xf32>,
    %c16 = arith.constant 16 : index
    %129 = memref.load %arg2[%c16] : memref<18xf32, #tpu.memory_space<smem>>
    %130 = vector.broadcast %129 : f32 to vector<1x3072xf32>
    %131 = arith.mulf %0, %130 : vector<1x3072xf32>
    %c16_50 = arith.constant 16 : index
    %132 = memref.load %arg3[%c16_50] : memref<18xf32, #tpu.memory_space<smem>>
    %133 = vector.broadcast %132 : f32 to vector<1x3072xf32>
    %134 = arith.addf %131, %133 : vector<1x3072xf32>
    %135 = math.tanh %134 : vector<1x3072xf32>
    %c16_51 = arith.constant 16 : index
    %c0_52 = arith.constant 0 : index
    %136 = vector.load %arg4[%c16_51, %c0_52] : memref<18x3072xf32, #tpu.memory_space<vmem>>, vector<1x3072xf32>
    tpu.vector_store %arg4[%c16_51, %c0_52], %135 {strides = array<i32>} : memref<18x3072xf32, #tpu.memory_space<vmem>>, vector<1x3072xf32>,
    %c17 = arith.constant 17 : index
    %137 = memref.load %arg2[%c17] : memref<18xf32, #tpu.memory_space<smem>>
    %138 = vector.broadcast %137 : f32 to vector<1x3072xf32>
    %139 = arith.mulf %0, %138 : vector<1x3072xf32>
    %c17_53 = arith.constant 17 : index
    %140 = memref.load %arg3[%c17_53] : memref<18xf32, #tpu.memory_space<smem>>
    %141 = vector.broadcast %140 : f32 to vector<1x3072xf32>
    %142 = arith.addf %139, %141 : vector<1x3072xf32>
    %143 = math.tanh %142 : vector<1x3072xf32>
    %c17_54 = arith.constant 17 : index
    %c0_55 = arith.constant 0 : index
    %144 = vector.load %arg4[%c17_54, %c0_55] : memref<18x3072xf32, #tpu.memory_space<vmem>>, vector<1x3072xf32>
    tpu.vector_store %arg4[%c17_54, %c0_55], %143 {strides = array<i32>} : memref<18x3072xf32, #tpu.memory_space<vmem>>, vector<1x3072xf32>,
    return
  }
  func.func @transform_0(%arg0: i32) -> (i32, i32) {
    %c0_i32 = arith.constant 0 : i32
    %c0_i32_0 = arith.constant 0 : i32
    return %c0_i32, %arg0 : i32, i32
  }
  func.func @transform_1(%arg0: i32) -> i32 {
    %c0_i32 = arith.constant 0 : i32
    %c0_i32_0 = arith.constant 0 : i32
    return %c0_i32 : i32
  }
  func.func @transform_2(%arg0: i32) -> i32 {
    %c0_i32 = arith.constant 0 : i32
    %c0_i32_0 = arith.constant 0 : i32
    return %c0_i32 : i32
  }
  func.func @transform_3(%arg0: i32) -> (i32, i32) {
    %c0_i32 = arith.constant 0 : i32
    %c0_i32_0 = arith.constant 0 : i32
    return %c0_i32, %arg0 : i32, i32
  }
}

</mosaic_0001>

<llo_original>
// kernel: tpu_custom_call.1
$region0: #{tpu_custom_call.1}
  #allocation0 [shape = 'u32[]', space=smem, size = 0x4, offset = 0x4, fixed_abs, tag = 'smem constant byte address 0x4 - core index']
  #allocation1 [shape = 'u32[144,128]{1,0:T(1,128)}', space=vmem, size = 0x12000, scoped, tag = 'internal scratch']
  %s0 = inlined_call_operand.hbm [shape: f32[1,6144], index: 0, kind: input, shape index: {}]
  %s1 = inlined_call_operand.vmem [shape: f32[18], index: 1, kind: input, shape index: {}]
  %s2 = inlined_call_operand.vmem [shape: f32[18], index: 2, kind: input, shape index: {}]
  %s3 = inlined_call_operand.hbm [shape: f32[18,6144], index: 3, kind: output, shape index: {}]
  %s4 = sld [smem:[#allocation0]]
  $region57: #{tpu_custom_call.1} parent=0
    _
  %s6 = ssub.s32 1, %s4
  %s7 = scalar_select 0, %s6, %s4
  $region1: #{tpu_custom_call.1} parent=0
    #allocation2 [shape = 'u8[24576]{0}', space=vmem, size = 0x6000, scoped, tag = 'input window, operand 0']
    #allocation3 [shape = 's32[2]{0}', space=sflag, size = 0x8, scoped, tag = 'scoped memory for tpu_custom_call.1']
    #allocation4 [shape = 's32[2]{0}', space=sflag, size = 0x8, scoped, tag = 'scoped memory for tpu_custom_call.1']
    #allocation5 [shape = 's32[2]{0}', space=sflag, size = 0x8, scoped, tag = 'scoped memory for tpu_custom_call.1']
    #allocation6 [shape = 'u8[512]{0}', space=smem, size = 0x200, scoped, tag = 'input window, operand 1, single buffered']
    #allocation7 [shape = 'u8[512]{0}', space=smem, size = 0x200, scoped, tag = 'input window, operand 2, single buffered']
    #allocation8 [shape = 's32[1]{0}', space=sflag, size = 0x4, scoped, tag = 'scoped memory for tpu_custom_call.1']
    #allocation9 [shape = 'u8[589824]{0}', space=vmem, size = 0x90000, scoped, tag = 'output window, operand 0']
    %8 = vsyncpa [#allocation3], 0
    %s9 = scalar_lea.sflag [#allocation3], 1
    %10 = vsyncpa %s9, 0
    %11 = vsyncpa [#allocation5], 0
    %12 = vsyncpa [#allocation8], 0
    %13 = vsyncpa [#allocation4], 0
    %s14 = scalar_lea.sflag [#allocation4], 1
    %15 = vsyncpa %s14, 0
    loop: start=0, step=1, limit=4
    $region2: #{tpu_custom_call.1} parent=1 // loop_pre_header
      _
    $region3: #{tpu_custom_call.1} parent=1 // loop_header
      %s17 = sphi 0, %s21
      %p18 = scmp.ge.s32.totalorder %s17, 4
      %s27 = sphi 0, %s29
      %s30 = sphi 0, %s27
      %s31 = sphi 0, %s30
      %s47 = sphi 0, %s31
      %s51 = sphi 0, %s51
      %s53 = sphi 0, %s51
      %s54 = sphi 0, %s53
      %s68 = sphi 0, %s54
      %s72 = sphi 0, %s72
      %s74 = sphi 0, %s72
      %s75 = sphi 0, %s74
      %s89 = sphi 0, %s75
      %s95 = sphi 0, %s97
      %s98 = sphi 0, %s95
      %s99 = sphi 0, %s98
      %s115 = sphi 0, %s99
    $region4: #{tpu_custom_call.1} parent=1 // loop_header_branch
      %20 = sbr.rel (%p18) target = $region8
    $region5: #{tpu_custom_call.1} parent=1 // loop_body
      %s22 = ssub.s32 %s17, 1
      %s23 = ssub.s32 %s17, 2
      %s24 = sadd.s32 %s17, 1
      %s25 = ssub.s32 %s17, %s24
      %p26 = scmp.eq.s32.totalorder %s25, 0
      %s28 = sadd.s32 %s27, 1
      %s29 = scalar_select %p26, %s27, %s28
      %p32 = pneg %p26
      %p33 = scmp.eq.s32.totalorder %s17, 1
      %p34 = por %p32, %p33
      %p35 = scmp.ne.s32.totalorder %s27, %s30
      %p36 = scmp.eq.s32.totalorder %s17, 0
      %p37 = por %p35, %p36
      %p38 = scmp.ne.s32.totalorder %s27, %s30
      %p39 = scmp.eq.s32.totalorder %s22, 1
      %p40 = por %p38, %p39
      %p41 = scmp.ne.s32.totalorder %s30, %s31
      %p42 = scmp.eq.s32.totalorder %s22, 0
      %p43 = por %p41, %p42
      %p44 = scmp.ne.s32.totalorder %s30, %s31
      %p45 = scmp.eq.s32.totalorder %s23, 1
      %p46 = por %p44, %p45
      %p48 = scmp.ne.s32.totalorder %s31, %s47
      %p49 = scmp.eq.s32.totalorder %s23, 0
      %p50 = por %p48, %p49
      %s52 = sadd.s32 %s51, 1
      %p55 = scmp.eq.s32.totalorder %s17, 1
      %p56 = scmp.ne.s32.totalorder %s51, %s53
      %p57 = scmp.eq.s32.totalorder %s17, 0
      %p58 = por %p56, %p57
      %p59 = scmp.ne.s32.totalorder %s51, %s53
      %p60 = scmp.eq.s32.totalorder %s22, 1
      %p61 = por %p59, %p60
      %p62 = scmp.ne.s32.totalorder %s53, %s54
      %p63 = scmp.eq.s32.totalorder %s22, 0
      %p64 = por %p62, %p63
      %p65 = scmp.ne.s32.totalorder %s53, %s54
      %p66 = scmp.eq.s32.totalorder %s23, 1
      %p67 = por %p65, %p66
      %p69 = scmp.ne.s32.totalorder %s54, %s68
      %p70 = scmp.eq.s32.totalorder %s23, 0
      %p71 = por %p69, %p70
      %s73 = sadd.s32 %s72, 1
      %p76 = scmp.eq.s32.totalorder %s17, 1
      %p77 = scmp.ne.s32.totalorder %s72, %s74
      %p78 = scmp.eq.s32.totalorder %s17, 0
      %p79 = por %p77, %p78
      %p80 = scmp.ne.s32.totalorder %s72, %s74
      %p81 = scmp.eq.s32.totalorder %s22, 1
      %p82 = por %p80, %p81
      %p83 = scmp.ne.s32.totalorder %s74, %s75
      %p84 = scmp.eq.s32.totalorder %s22, 0
      %p85 = por %p83, %p84
      %p86 = scmp.ne.s32.totalorder %s74, %s75
      %p87 = scmp.eq.s32.totalorder %s23, 1
      %p88 = por %p86, %p87
      %p90 = scmp.ne.s32.totalorder %s75, %s89
      %p91 = scmp.eq.s32.totalorder %s23, 0
      %p92 = por %p90, %p91
      %s93 = ssub.s32 %s17, %s24
      %p94 = scmp.eq.s32.totalorder %s93, 0
      %s96 = sadd.s32 %s95, 1
      %s97 = scalar_select %p94, %s95, %s96
      %p100 = pneg %p94
      %p101 = scmp.eq.s32.totalorder %s17, 1
      %p102 = por %p100, %p101
      %p103 = scmp.ne.s32.totalorder %s95, %s98
      %p104 = scmp.eq.s32.totalorder %s17, 0
      %p105 = por %p103, %p104
      %p106 = scmp.ne.s32.totalorder %s95, %s98
      %p107 = scmp.eq.s32.totalorder %s22, 1
      %p108 = por %p106, %p107
      %p109 = scmp.ne.s32.totalorder %s98, %s99
      %p110 = scmp.eq.s32.totalorder %s22, 0
      %p111 = por %p109, %p110
      %p112 = scmp.ne.s32.totalorder %s98, %s99
      %p113 = scmp.eq.s32.totalorder %s23, 1
      %p114 = por %p112, %p113
      %p116 = scmp.ne.s32.totalorder %s99, %s115
      %p117 = scmp.eq.s32.totalorder %s23, 0
      %p118 = por %p116, %p117
      %p119 = scmp.le.s32.totalorder 1, %s17
      %p120 = scmp.lt.s32.totalorder %s17, 3
      %p121 = pnand %p119, %p120
      %p122 = pneg %p121
      // Predicated region
      $region9: #{tpu_custom_call.1} parent=5 // pred_check
        _
      $region10: #{tpu_custom_call.1} parent=5 // pred_check_branch
        %124 = sbr.rel (%p121) target = $region12
      $region11: #{tpu_custom_call.1} parent=5 // pred_region
        %s125 = ssub.s32 %s17, 1
        // Predicated region
        $region13: #{tpu_custom_call.1} parent=11 // pred_check
          %p126 = pneg %p64
        $region14: #{tpu_custom_call.1} parent=11 // pred_check_branch
          %128 = sbr.rel (%p126) target = $region16
        $region15: #{tpu_custom_call.1} parent=11 // pred_region
          %s130 = ssub.s32 16, 16
          %131 = vsyncadd [#allocation5], %s130
          %s133 = sshll.u32 %s1, 4
          %s134 = int_to_ptr.vmem [resolvable:$true] %s133
          %136 = dma.vmem_to_smem %s134, 16, [#allocation6], [#allocation5]
        $region16: #{tpu_custom_call.1} parent=11 // pred_fallthru
          _
        // Predicated region
        $region17: #{tpu_custom_call.1} parent=11 // pred_check
          %p137 = pneg %p85
        $region18: #{tpu_custom_call.1} parent=11 // pred_check_branch
          %139 = sbr.rel (%p137) target = $region20
        $region19: #{tpu_custom_call.1} parent=11 // pred_region
          %s141 = ssub.s32 16, 16
          %142 = vsyncadd [#allocation8], %s141
          %s144 = sshll.u32 %s2, 4
          %s145 = int_to_ptr.vmem [resolvable:$true] %s144
          %147 = dma.vmem_to_smem %s145, 16, [#allocation7], [#allocation8]
        $region20: #{tpu_custom_call.1} parent=11 // pred_fallthru
          _
      $region12: #{tpu_custom_call.1} parent=5 // pred_fallthru
        _
      %p148 = scmp.lt.s32.totalorder %s17, 2
      // Predicated region
      $region21: #{tpu_custom_call.1} parent=5 // pred_check
        %p149 = pneg %p148
      $region22: #{tpu_custom_call.1} parent=5 // pred_check_branch
        %151 = sbr.rel (%p149) target = $region24
      $region23: #{tpu_custom_call.1} parent=5 // pred_region
        // Predicated region
        $region25: #{tpu_custom_call.1} parent=23 // pred_check
          %p152 = pneg %p37
        $region26: #{tpu_custom_call.1} parent=23 // pred_check_branch
          %154 = sbr.rel (%p152) target = $region28
        $region27: #{tpu_custom_call.1} parent=23 // pred_region
          %s155 = sand.u32 %s27, 1
          %s156 = scalar_lea.sflag [#allocation3], %s155
          %s157 = sand.u32 %s27, 1
          %s158 = smul.addr %s157, 24
          %s159 = scalar_lea.vmem [#allocation2], %s158
          %s160 = smul.u32 24, %s17
          %s162 = ssub.s32 384, 384
          %163 = vsyncadd %s156, %s162
          %s164 = smul.addr %s160, 16
          %s165 = scalar_lea.hbm %s0, %s164
          %s167 = sshll.u32 %s159, 4
          %s168 = int_to_ptr.vmem [resolvable:$true] %s167
          %170 = dma.hbm_to_vmem [thread:$0]  %s165, 384, %s168, %s156
        $region28: #{tpu_custom_call.1} parent=23 // pred_fallthru
          _
      $region24: #{tpu_custom_call.1} parent=5 // pred_fallthru
        _
      %p171 = scmp.le.s32.totalorder 1, %s17
      %p172 = scmp.lt.s32.totalorder %s17, 3
      %p173 = pnand %p171, %p172
      %p174 = pneg %p173
      // Predicated region
      $region29: #{tpu_custom_call.1} parent=5 // pred_check
        _
      $region30: #{tpu_custom_call.1} parent=5 // pred_check_branch
        %176 = sbr.rel (%p173) target = $region32
      $region31: #{tpu_custom_call.1} parent=5 // pred_region
        %s177 = ssub.s32 %s17, 1
        %s178 = sand.u32 %s30, 1
        %s179 = scalar_lea.sflag [#allocation3], %s178
        %s180 = sand.u32 %s30, 1
        %s181 = smul.addr %s180, 24
        %s182 = scalar_lea.vmem [#allocation2], %s181
        // Predicated region
        $region33: #{tpu_custom_call.1} parent=31 // pred_check
          %p183 = pneg %p43
        $region34: #{tpu_custom_call.1} parent=31 // pred_check_branch
          %185 = sbr.rel (%p183) target = $region36
        $region35: #{tpu_custom_call.1} parent=31 // pred_region
          %186 = dma.done %s179, 384
        $region36: #{tpu_custom_call.1} parent=31 // pred_fallthru
          _
        // Predicated region
        $region37: #{tpu_custom_call.1} parent=31 // pred_check
          %p187 = pneg %p64
        $region38: #{tpu_custom_call.1} parent=31 // pred_check_branch
          %189 = sbr.rel (%p187) target = $region40
        $region39: #{tpu_custom_call.1} parent=31 // pred_region
          %190 = dma.done [#allocation5], 16
        $region40: #{tpu_custom_call.1} parent=31 // pred_fallthru
          _
        // Predicated region
        $region41: #{tpu_custom_call.1} parent=31 // pred_check
          %p191 = pneg %p85
        $region42: #{tpu_custom_call.1} parent=31 // pred_check_branch
          %193 = sbr.rel (%p191) target = $region44
        $region43: #{tpu_custom_call.1} parent=31 // pred_region
          %194 = dma.done [#allocation8], 16
        $region44: #{tpu_custom_call.1} parent=31 // pred_fallthru
          _
        %195 = sfence
        %s196 = sand.u32 %s30, 1
        %s197 = scalar_lea.sflag [#allocation3], %s196
        %s198 = sand.u32 %s30, 1
        %s199 = smul.addr %s198, 24
        %s200 = scalar_lea.vmem [#allocation2], %s199
        %p201 = pneg %p43
        %p202 = pneg %p40
        %p203 = pneg %p64
        %p204 = pneg %p61
        %p205 = pneg %p85
        %p206 = pneg %p82
        %p207 = pneg %p111
        %p208 = pneg %p108
        %s209 = sand.u32 %s98, 1
        %s210 = scalar_lea.sflag [#allocation4], %s209
        %s211 = sand.u32 %s98, 1
        %s212 = smul.addr %s211, 576
        %s213 = scalar_lea.vmem [#allocation9], %s212
        %s214 = smul.u32 24, %s22
        %s215 = smul.u32 24, %s22
        %v216 = vld [vmem:[%s182] sm:$0xff]
        %v217 = vld [vmem:[%s182 + $0x8] sm:$0xff]
        %v218 = vld [vmem:[%s182 + $0x10] sm:$0xff]
        %s219 = sld [smem:[#allocation6]]
        %v220 = vstv %s219
        %v221 = vmul.f32 %v216, %v220
        %v222 = vmul.f32 %v217, %v220
        %v223 = vmul.f32 %v218, %v220
        %s224 = sld [smem:[#allocation7]]
        %v225 = vstv %s224
        %v226 = vadd.f32 %v221, %v225
        %v227 = vadd.f32 %v222, %v225
        %v228 = vadd.f32 %v223, %v225
        %v229 = vtanh.pop %v226
        %v230 = vtanh.pop %v227
        %v231 = vtanh.pop %v228
        %232 = vst [vmem:[%s213] ss:$8 sm:$0xf] %v229
        %233 = vst [vmem:[%s213] ss:$8 sm:$0xf0] %v229
        %s234 = scalar_lea.vmem %s213, 64 [#allocation9]
        %235 = vst [vmem:[%s234] ss:$8 sm:$0xf] %v230
        %236 = vst [vmem:[%s234] ss:$8 sm:$0xf0] %v230
        %s237 = scalar_lea.vmem %s213, 128 [#allocation9]
        %238 = vst [vmem:[%s237] ss:$8 sm:$0xf] %v231
        %239 = vst [vmem:[%s237] ss:$8 sm:$0xf0] %v231
        %s240 = sld [smem:[#allocation6 + $0x1]]
        %v241 = vstv %s240
        %v242 = vmul.f32 %v216, %v241
        %v243 = vmul.f32 %v217, %v241
        %v244 = vmul.f32 %v218, %v241
        %s245 = sld [smem:[#allocation7 + $0x1]]
        %v246 = vstv %s245
        %v247 = vadd.f32 %v242, %v246
        %v248 = vadd.f32 %v243, %v246
        %v249 = vadd.f32 %v244, %v246
        %v250 = vtanh.pop %v247
        %v251 = vtanh.pop %v248
        %v252 = vtanh.pop %v249
        %s253 = scalar_lea.vmem %s213, 1 [#allocation9]
        %254 = vst [vmem:[%s253] ss:$8 sm:$0xf] %v250
        %255 = vst [vmem:[%s253] ss:$8 sm:$0xf0] %v250
        %s256 = scalar_lea.vmem %s213, 65 [#allocation9]
        %257 = vst [vmem:[%s256] ss:$8 sm:$0xf] %v251
        %258 = vst [vmem:[%s256] ss:$8 sm:$0xf0] %v251
        %s259 = scalar_lea.vmem %s213, 129 [#allocation9]
        %260 = vst [vmem:[%s259] ss:$8 sm:$0xf] %v252
        %261 = vst [vmem:[%s259] ss:$8 sm:$0xf0] %v252
        %s262 = sld [smem:[#allocation6 + $0x2]]
        %v263 = vstv %s262
        %v264 = vmul.f32 %v216, %v263
        %v265 = vmul.f32 %v217, %v263
        %v266 = vmul.f32 %v218, %v263
        %s267 = sld [smem:[#allocation7 + $0x2]]
        %v268 = vstv %s267
        %v269 = vadd.f32 %v264, %v268
        %v270 = vadd.f32 %v265, %v268
        %v271 = vadd.f32 %v266, %v268
        %v272 = vtanh.pop %v269
        %v273 = vtanh.pop %v270
        %v274 = vtanh.pop %v271
        %s275 = scalar_lea.vmem %s213, 2 [#allocation9]
        %276 = vst [vmem:[%s275] ss:$8 sm:$0xf] %v272
        %277 = vst [vmem:[%s275] ss:$8 sm:$0xf0] %v272
        %s278 = scalar_lea.vmem %s213, 66 [#allocation9]
        %279 = vst [vmem:[%s278] ss:$8 sm:$0xf] %v273
        %280 = vst [vmem:[%s278] ss:$8 sm:$0xf0] %v273
        %s281 = scalar_lea.vmem %s213, 130 [#allocation9]
        %282 = vst [vmem:[%s281] ss:$8 sm:$0xf] %v274
        %283 = vst [vmem:[%s281] ss:$8 sm:$0xf0] %v274
        %s284 = sld [smem:[#allocation6 + $0x3]]
        %v285 = vstv %s284
        %v286 = vmul.f32 %v216, %v285
        %v287 = vmul.f32 %v217, %v285
        %v288 = vmul.f32 %v218, %v285
        %s289 = sld [smem:[#allocation7 + $0x3]]
        %v290 = vstv %s289
        %v291 = vadd.f32 %v286, %v290
        %v292 = vadd.f32 %v287, %v290
        %v293 = vadd.f32 %v288, %v290
        %v294 = vtanh.pop %v291
        %v295 = vtanh.pop %v292
        %v296 = vtanh.pop %v293
        %s297 = scalar_lea.vmem %s213, 3 [#allocation9]
        %298 = vst [vmem:[%s297] ss:$8 sm:$0xf] %v294
        %299 = vst [vmem:[%s297] ss:$8 sm:$0xf0] %v294
        %s300 = scalar_lea.vmem %s213, 67 [#allocation9]
        %301 = vst [vmem:[%s300] ss:$8 sm:$0xf] %v295
        %302 = vst [vmem:[%s300] ss:$8 sm:$0xf0] %v295
        %s303 = scalar_lea.vmem %s213, 131 [#allocation9]
        %304 = vst [vmem:[%s303] ss:$8 sm:$0xf] %v296
        %305 = vst [vmem:[%s303] ss:$8 sm:$0xf0] %v296
        %s306 = sld [smem:[#allocation6 + $0x4]]
        %v307 = vstv %s306
        %v308 = vmul.f32 %v216, %v307
        %v309 = vmul.f32 %v217, %v307
        %v310 = vmul.f32 %v218, %v307
        %s311 = sld [smem:[#allocation7 + $0x4]]
        %v312 = vstv %s311
        %v313 = vadd.f32 %v308, %v312
        %v314 = vadd.f32 %v309, %v312
        %v315 = vadd.f32 %v310, %v312
        %v316 = vtanh.pop %v313
        %v317 = vtanh.pop %v314
        %v318 = vtanh.pop %v315
        %s319 = scalar_lea.vmem %s213, 4 [#allocation9]
        %320 = vst [vmem:[%s319] ss:$8 sm:$0xf] %v316
        %321 = vst [vmem:[%s319] ss:$8 sm:$0xf0] %v316
        %s322 = scalar_lea.vmem %s213, 68 [#allocation9]
        %323 = vst [vmem:[%s322] ss:$8 sm:$0xf] %v317
        %324 = vst [vmem:[%s322] ss:$8 sm:$0xf0] %v317
        %s325 = scalar_lea.vmem %s213, 132 [#allocation9]
        %326 = vst [vmem:[%s325] ss:$8 sm:$0xf] %v318
        %327 = vst [vmem:[%s325] ss:$8 sm:$0xf0] %v318
        %s328 = sld [smem:[#allocation6 + $0x5]]
        %v329 = vstv %s328
        %v330 = vmul.f32 %v216, %v329
        %v331 = vmul.f32 %v217, %v329
        %v332 = vmul.f32 %v218, %v329
        %s333 = sld [smem:[#allocation7 + $0x5]]
        %v334 = vstv %s333
        %v335 = vadd.f32 %v330, %v334
        %v336 = vadd.f32 %v331, %v334
        %v337 = vadd.f32 %v332, %v334
        %v338 = vtanh.pop %v335
        %v339 = vtanh.pop %v336
        %v340 = vtanh.pop %v337
        %s341 = scalar_lea.vmem %s213, 5 [#allocation9]
        %342 = vst [vmem:[%s341] ss:$8 sm:$0xf] %v338
        %343 = vst [vmem:[%s341] ss:$8 sm:$0xf0] %v338
        %s344 = scalar_lea.vmem %s213, 69 [#allocation9]
        %345 = vst [vmem:[%s344] ss:$8 sm:$0xf] %v339
        %346 = vst [vmem:[%s344] ss:$8 sm:$0xf0] %v339
        %s347 = scalar_lea.vmem %s213, 133 [#allocation9]
        %348 = vst [vmem:[%s347] ss:$8 sm:$0xf] %v340
        %349 = vst [vmem:[%s347] ss:$8 sm:$0xf0] %v340
        %s350 = sld [smem:[#allocation6 + $0x6]]
        %v351 = vstv %s350
        %v352 = vmul.f32 %v216, %v351
        %v353 = vmul.f32 %v217, %v351
        %v354 = vmul.f32 %v218, %v351
        %s355 = sld [smem:[#allocation7 + $0x6]]
        %v356 = vstv %s355
        %v357 = vadd.f32 %v352, %v356
        %v358 = vadd.f32 %v353, %v356
        %v359 = vadd.f32 %v354, %v356
        %v360 = vtanh.pop %v357
        %v361 = vtanh.pop %v358
        %v362 = vtanh.pop %v359
        %s363 = scalar_lea.vmem %s213, 6 [#allocation9]
        %364 = vst [vmem:[%s363] ss:$8 sm:$0xf] %v360
        %365 = vst [vmem:[%s363] ss:$8 sm:$0xf0] %v360
        %s366 = scalar_lea.vmem %s213, 70 [#allocation9]
        %367 = vst [vmem:[%s366] ss:$8 sm:$0xf] %v361
        %368 = vst [vmem:[%s366] ss:$8 sm:$0xf0] %v361
        %s369 = scalar_lea.vmem %s213, 134 [#allocation9]
        %370 = vst [vmem:[%s369] ss:$8 sm:$0xf] %v362
        %371 = vst [vmem:[%s369] ss:$8 sm:$0xf0] %v362
        %s372 = sld [smem:[#allocation6 + $0x7]]
        %v373 = vstv %s372
        %v374 = vmul.f32 %v216, %v373
        %v375 = vmul.f32 %v217, %v373
        %v376 = vmul.f32 %v218, %v373
        %s377 = sld [smem:[#allocation7 + $0x7]]
        %v378 = vstv %s377
        %v379 = vadd.f32 %v374, %v378
        %v380 = vadd.f32 %v375, %v378
        %v381 = vadd.f32 %v376, %v378
        %v382 = vtanh.pop %v379
        %v383 = vtanh.pop %v380
        %v384 = vtanh.pop %v381
        %s385 = scalar_lea.vmem %s213, 7 [#allocation9]
        %386 = vst [vmem:[%s385] ss:$8 sm:$0xf] %v382
        %387 = vst [vmem:[%s385] ss:$8 sm:$0xf0] %v382
        %s388 = scalar_lea.vmem %s213, 71 [#allocation9]
        %389 = vst [vmem:[%s388] ss:$8 sm:$0xf] %v383
        %390 = vst [vmem:[%s388] ss:$8 sm:$0xf0] %v383
        %s391 = scalar_lea.vmem %s213, 135 [#allocation9]
        %392 = vst [vmem:[%s391] ss:$8 sm:$0xf] %v384
        %393 = vst [vmem:[%s391] ss:$8 sm:$0xf0] %v384
        %s394 = sld [smem:[#allocation6 + $0x8]]
        %v395 = vstv %s394
        %v396 = vmul.f32 %v216, %v395
        %v397 = vmul.f32 %v217, %v395
        %v398 = vmul.f32 %v218, %v395
        %s399 = sld [smem:[#allocation7 + $0x8]]
        %v400 = vstv %s399
        %v401 = vadd.f32 %v396, %v400
        %v402 = vadd.f32 %v397, %v400
        %v403 = vadd.f32 %v398, %v400
        %v404 = vtanh.pop %v401
        %v405 = vtanh.pop %v402
        %v406 = vtanh.pop %v403
        %s407 = scalar_lea.vmem %s213, 192 [#allocation9]
        %408 = vst [vmem:[%s407] ss:$8 sm:$0xf] %v404
        %409 = vst [vmem:[%s407] ss:$8 sm:$0xf0] %v404
        %s410 = scalar_lea.vmem %s213, 256 [#allocation9]
        %411 = vst [vmem:[%s410] ss:$8 sm:$0xf] %v405
        %412 = vst [vmem:[%s410] ss:$8 sm:$0xf0] %v405
        %s413 = scalar_lea.vmem %s213, 320 [#allocation9]
        %414 = vst [vmem:[%s413] ss:$8 sm:$0xf] %v406
        %415 = vst [vmem:[%s413] ss:$8 sm:$0xf0] %v406
        %s416 = sld [smem:[#allocation6 + $0x9]]
        %v417 = vstv %s416
        %v418 = vmul.f32 %v216, %v417
        %v419 = vmul.f32 %v217, %v417
        %v420 = vmul.f32 %v218, %v417
        %s421 = sld [smem:[#allocation7 + $0x9]]
        %v422 = vstv %s421
        %v423 = vadd.f32 %v418, %v422
        %v424 = vadd.f32 %v419, %v422
        %v425 = vadd.f32 %v420, %v422
        %v426 = vtanh.pop %v423
        %v427 = vtanh.pop %v424
        %v428 = vtanh.pop %v425
        %s429 = scalar_lea.vmem %s213, 193 [#allocation9]
        %430 = vst [vmem:[%s429] ss:$8 sm:$0xf] %v426
        %431 = vst [vmem:[%s429] ss:$8 sm:$0xf0] %v426
        %s432 = scalar_lea.vmem %s213, 257 [#allocation9]
        %433 = vst [vmem:[%s432] ss:$8 sm:$0xf] %v427
        %434 = vst [vmem:[%s432] ss:$8 sm:$0xf0] %v427
        %s435 = scalar_lea.vmem %s213, 321 [#allocation9]
        %436 = vst [vmem:[%s435] ss:$8 sm:$0xf] %v428
        %437 = vst [vmem:[%s435] ss:$8 sm:$0xf0] %v428
        %s438 = sld [smem:[#allocation6 + $0xa]]
        %v439 = vstv %s438
        %v440 = vmul.f32 %v216, %v439
        %v441 = vmul.f32 %v217, %v439
        %v442 = vmul.f32 %v218, %v439
        %s443 = sld [smem:[#allocation7 + $0xa]]
        %v444 = vstv %s443
        %v445 = vadd.f32 %v440, %v444
        %v446 = vadd.f32 %v441, %v444
        %v447 = vadd.f32 %v442, %v444
        %v448 = vtanh.pop %v445
        %v449 = vtanh.pop %v446
        %v450 = vtanh.pop %v447
        %s451 = scalar_lea.vmem %s213, 194 [#allocation9]
        %452 = vst [vmem:[%s451] ss:$8 sm:$0xf] %v448
        %453 = vst [vmem:[%s451] ss:$8 sm:$0xf0] %v448
        %s454 = scalar_lea.vmem %s213, 258 [#allocation9]
        %455 = vst [vmem:[%s454] ss:$8 sm:$0xf] %v449
        %456 = vst [vmem:[%s454] ss:$8 sm:$0xf0] %v449
        %s457 = scalar_lea.vmem %s213, 322 [#allocation9]
        %458 = vst [vmem:[%s457] ss:$8 sm:$0xf] %v450
        %459 = vst [vmem:[%s457] ss:$8 sm:$0xf0] %v450
        %s460 = sld [smem:[#allocation6 + $0xb]]
        %v461 = vstv %s460
        %v462 = vmul.f32 %v216, %v461
        %v463 = vmul.f32 %v217, %v461
        %v464 = vmul.f32 %v218, %v461
        %s465 = sld [smem:[#allocation7 + $0xb]]
        %v466 = vstv %s465
        %v467 = vadd.f32 %v462, %v466
        %v468 = vadd.f32 %v463, %v466
        %v469 = vadd.f32 %v464, %v466
        %v470 = vtanh.pop %v467
        %v471 = vtanh.pop %v468
        %v472 = vtanh.pop %v469
        %s473 = scalar_lea.vmem %s213, 195 [#allocation9]
        %474 = vst [vmem:[%s473] ss:$8 sm:$0xf] %v470
        %475 = vst [vmem:[%s473] ss:$8 sm:$0xf0] %v470
        %s476 = scalar_lea.vmem %s213, 259 [#allocation9]
        %477 = vst [vmem:[%s476] ss:$8 sm:$0xf] %v471
        %478 = vst [vmem:[%s476] ss:$8 sm:$0xf0] %v471
        %s479 = scalar_lea.vmem %s213, 323 [#allocation9]
        %480 = vst [vmem:[%s479] ss:$8 sm:$0xf] %v472
        %481 = vst [vmem:[%s479] ss:$8 sm:$0xf0] %v472
        %s482 = sld [smem:[#allocation6 + $0xc]]
        %v483 = vstv %s482
        %v484 = vmul.f32 %v216, %v483
        %v485 = vmul.f32 %v217, %v483
        %v486 = vmul.f32 %v218, %v483
        %s487 = sld [smem:[#allocation7 + $0xc]]
        %v488 = vstv %s487
        %v489 = vadd.f32 %v484, %v488
        %v490 = vadd.f32 %v485, %v488
        %v491 = vadd.f32 %v486, %v488
        %v492 = vtanh.pop %v489
        %v493 = vtanh.pop %v490
        %v494 = vtanh.pop %v491
        %s495 = scalar_lea.vmem %s213, 196 [#allocation9]
        %496 = vst [vmem:[%s495] ss:$8 sm:$0xf] %v492
        %497 = vst [vmem:[%s495] ss:$8 sm:$0xf0] %v492
        %s498 = scalar_lea.vmem %s213, 260 [#allocation9]
        %499 = vst [vmem:[%s498] ss:$8 sm:$0xf] %v493
        %500 = vst [vmem:[%s498] ss:$8 sm:$0xf0] %v493
        %s501 = scalar_lea.vmem %s213, 324 [#allocation9]
        %502 = vst [vmem:[%s501] ss:$8 sm:$0xf] %v494
        %503 = vst [vmem:[%s501] ss:$8 sm:$0xf0] %v494
        %s504 = sld [smem:[#allocation6 + $0xd]]
        %v505 = vstv %s504
        %v506 = vmul.f32 %v216, %v505
        %v507 = vmul.f32 %v217, %v505
        %v508 = vmul.f32 %v218, %v505
        %s509 = sld [smem:[#allocation7 + $0xd]]
        %v510 = vstv %s509
        %v511 = vadd.f32 %v506, %v510
        %v512 = vadd.f32 %v507, %v510
        %v513 = vadd.f32 %v508, %v510
        %v514 = vtanh.pop %v511
        %v515 = vtanh.pop %v512
        %v516 = vtanh.pop %v513
        %s517 = scalar_lea.vmem %s213, 197 [#allocation9]
        %518 = vst [vmem:[%s517] ss:$8 sm:$0xf] %v514
        %519 = vst [vmem:[%s517] ss:$8 sm:$0xf0] %v514
        %s520 = scalar_lea.vmem %s213, 261 [#allocation9]
        %521 = vst [vmem:[%s520] ss:$8 sm:$0xf] %v515
        %522 = vst [vmem:[%s520] ss:$8 sm:$0xf0] %v515
        %s523 = scalar_lea.vmem %s213, 325 [#allocation9]
        %524 = vst [vmem:[%s523] ss:$8 sm:$0xf] %v516
        %525 = vst [vmem:[%s523] ss:$8 sm:$0xf0] %v516
        %s526 = sld [smem:[#allocation6 + $0xe]]
        %v527 = vstv %s526
        %v528 = vmul.f32 %v216, %v527
        %v529 = vmul.f32 %v217, %v527
        %v530 = vmul.f32 %v218, %v527
        %s531 = sld [smem:[#allocation7 + $0xe]]
        %v532 = vstv %s531
        %v533 = vadd.f32 %v528, %v532
        %v534 = vadd.f32 %v529, %v532
        %v535 = vadd.f32 %v530, %v532
        %v536 = vtanh.pop %v533
        %v537 = vtanh.pop %v534
        %v538 = vtanh.pop %v535
        %s539 = scalar_lea.vmem %s213, 198 [#allocation9]
        %540 = vst [vmem:[%s539] ss:$8 sm:$0xf] %v536
        %541 = vst [vmem:[%s539] ss:$8 sm:$0xf0] %v536
        %s542 = scalar_lea.vmem %s213, 262 [#allocation9]
        %543 = vst [vmem:[%s542] ss:$8 sm:$0xf] %v537
        %544 = vst [vmem:[%s542] ss:$8 sm:$0xf0] %v537
        %s545 = scalar_lea.vmem %s213, 326 [#allocation9]
        %546 = vst [vmem:[%s545] ss:$8 sm:$0xf] %v538
        %547 = vst [vmem:[%s545] ss:$8 sm:$0xf0] %v538
        %s548 = sld [smem:[#allocation6 + $0xf]]
        %v549 = vstv %s548
        %v550 = vmul.f32 %v216, %v549
        %v551 = vmul.f32 %v217, %v549
        %v552 = vmul.f32 %v218, %v549
        %s553 = sld [smem:[#allocation7 + $0xf]]
        %v554 = vstv %s553
        %v555 = vadd.f32 %v550, %v554
        %v556 = vadd.f32 %v551, %v554
        %v557 = vadd.f32 %v552, %v554
        %v558 = vtanh.pop %v555
        %v559 = vtanh.pop %v556
        %v560 = vtanh.pop %v557
        %s561 = scalar_lea.vmem %s213, 199 [#allocation9]
        %562 = vst [vmem:[%s561] ss:$8 sm:$0xf] %v558
        %563 = vst [vmem:[%s561] ss:$8 sm:$0xf0] %v558
        %s564 = scalar_lea.vmem %s213, 263 [#allocation9]
        %565 = vst [vmem:[%s564] ss:$8 sm:$0xf] %v559
        %566 = vst [vmem:[%s564] ss:$8 sm:$0xf0] %v559
        %s567 = scalar_lea.vmem %s213, 327 [#allocation9]
        %568 = vst [vmem:[%s567] ss:$8 sm:$0xf] %v560
        %569 = vst [vmem:[%s567] ss:$8 sm:$0xf0] %v560
        %s570 = sld [smem:[#allocation6 + $0x10]]
        %v571 = vstv %s570
        %v572 = vmul.f32 %v216, %v571
        %v573 = vmul.f32 %v217, %v571
        %v574 = vmul.f32 %v218, %v571
        %s575 = sld [smem:[#allocation7 + $0x10]]
        %v576 = vstv %s575
        %v577 = vadd.f32 %v572, %v576
        %v578 = vadd.f32 %v573, %v576
        %v579 = vadd.f32 %v574, %v576
        %v580 = vtanh.pop %v577
        %v581 = vtanh.pop %v578
        %v582 = vtanh.pop %v579
        %s583 = scalar_lea.vmem %s213, 384 [#allocation9]
        %584 = vst [vmem:[%s583] ss:$8 sm:$0xf] %v580
        %585 = vst [vmem:[%s583] ss:$8 sm:$0xf0] %v580
        %s586 = scalar_lea.vmem %s213, 448 [#allocation9]
        %587 = vst [vmem:[%s586] ss:$8 sm:$0xf] %v581
        %588 = vst [vmem:[%s586] ss:$8 sm:$0xf0] %v581
        %s589 = scalar_lea.vmem %s213, 512 [#allocation9]
        %590 = vst [vmem:[%s589] ss:$8 sm:$0xf] %v582
        %591 = vst [vmem:[%s589] ss:$8 sm:$0xf0] %v582
        %s592 = sld [smem:[#allocation6 + $0x11]]
        %v593 = vstv %s592
        %v594 = vmul.f32 %v216, %v593
        %v595 = vmul.f32 %v217, %v593
        %v596 = vmul.f32 %v218, %v593
        %s597 = sld [smem:[#allocation7 + $0x11]]
        %v598 = vstv %s597
        %v599 = vadd.f32 %v594, %v598
        %v600 = vadd.f32 %v595, %v598
        %v601 = vadd.f32 %v596, %v598
        %v602 = vtanh.pop %v599
        %v603 = vtanh.pop %v600
        %v604 = vtanh.pop %v601
        %s605 = scalar_lea.vmem %s213, 385 [#allocation9]
        %606 = vst [vmem:[%s605] ss:$8 sm:$0xf] %v602
        %607 = vst [vmem:[%s605] ss:$8 sm:$0xf0] %v602
        %s608 = scalar_lea.vmem %s213, 449 [#allocation9]
        %609 = vst [vmem:[%s608] ss:$8 sm:$0xf] %v603
        %610 = vst [vmem:[%s608] ss:$8 sm:$0xf0] %v603
        %s611 = scalar_lea.vmem %s213, 513 [#allocation9]
        %612 = vst [vmem:[%s611] ss:$8 sm:$0xf] %v604
        %613 = vst [vmem:[%s611] ss:$8 sm:$0xf0] %v604
        %s614 = sand.u32 %s98, 1
        %s615 = scalar_lea.sflag [#allocation4], %s614
        %s616 = sand.u32 %s98, 1
        %s617 = smul.addr %s616, 576
        %s618 = scalar_lea.vmem [#allocation9], %s617
        // Predicated region
        $region45: #{tpu_custom_call.1} parent=31 // pred_check
          %p619 = pneg %p108
        $region46: #{tpu_custom_call.1} parent=31 // pred_check_branch
          %621 = sbr.rel (%p619) target = $region48
        $region47: #{tpu_custom_call.1} parent=31 // pred_region
          %s622 = smul.u32 24, %s22
          %s624 = ssub.s32 9216, 9216
          %625 = vsyncadd %s615, %s624
          %s626 = smul.addr %s622, 128
          %s627 = scalar_lea.hbm %s3, %s626
          %s628 = sshll.u32 %s618, 4
          %s629 = int_to_ptr.vmem [resolvable:$true] %s628
          %634 = dma.vmem_to_hbm [thread:$0]  %s629, 9216, %s627, %s615, 3072, 6144, 192
        $region48: #{tpu_custom_call.1} parent=31 // pred_fallthru
          _
      $region32: #{tpu_custom_call.1} parent=5 // pred_fallthru
        _
      %p635 = scmp.le.s32.totalorder 2, %s17
      // Predicated region
      $region49: #{tpu_custom_call.1} parent=5 // pred_check
        %p636 = pneg %p635
      $region50: #{tpu_custom_call.1} parent=5 // pred_check_branch
        %638 = sbr.rel (%p636) target = $region52
      $region51: #{tpu_custom_call.1} parent=5 // pred_region
        %s639 = ssub.s32 %s17, 2
        // Predicated region
        $region53: #{tpu_custom_call.1} parent=51 // pred_check
          %p640 = pneg %p114
        $region54: #{tpu_custom_call.1} parent=51 // pred_check_branch
          %642 = sbr.rel (%p640) target = $region56
        $region55: #{tpu_custom_call.1} parent=51 // pred_region
          %s643 = sand.u32 %s99, 1
          %s644 = scalar_lea.sflag [#allocation4], %s643
          %s645 = sand.u32 %s99, 1
          %s646 = smul.addr %s645, 576
          %s647 = scalar_lea.vmem [#allocation9], %s646
          %648 = dma.done %s644, 9216
        $region56: #{tpu_custom_call.1} parent=51 // pred_fallthru
          _
      $region52: #{tpu_custom_call.1} parent=5 // pred_fallthru
        _
    $region6: #{tpu_custom_call.1} parent=1 // loop_footer
      %s21 = sadd.s32 1, %s17
    $region7: #{tpu_custom_call.1} parent=1 // loop_footer_branch
      %16 = sbr.rel target = $region3
    $region8: #{tpu_custom_call.1} parent=1 // loop_exit
      _
    %649 = vsyncpa [#allocation3], 1
    %s650 = scalar_lea.sflag [#allocation3], 1
    %651 = vsyncpa %s650, 1
    %652 = vsyncpa [#allocation4], 1
    %s653 = scalar_lea.sflag [#allocation4], 1
    %654 = vsyncpa %s653, 1
    %655 = vsyncpa [#allocation5], 1
    %s656 = scalar_lea.sflag [#allocation5], 1
    %657 = vsyncpa %s656, 1
    %658 = vsyncpa [#allocation8], 1

</llo_original>
